<compile_context>
chip_gen: v7x
topology: tpu7x:2x2x1
jax: 0.10.0
libtpu: 0.0.40
codegen_flags: <defaults>
</compile_context>

<pallas_src>
import functools

import jax
import jax.numpy as jnp
from jax.experimental import pallas as pl
from jax.experimental.pallas import tpu as pltpu


# ---------------------------------------------------------------------------
# Fused kernel: conv3x3 (one im2col dot) + ReLU + ChannelAttention, pre-shuffle.
# ---------------------------------------------------------------------------
def _fused_upshuffle_kernel(hw, p_ref, w_ref, b_ref, pool_ref, grp_ref, grpe_ref,
                            w1_ref, b1_ref, w2_ref, b2_ref, o_ref):
    # p_ref   : (M, K)   bf16  im2col patches, M = bb*H*W, K = 9*Cin
    # w_ref   : (K, C4)  bf16  conv weights (HWIO flattened to (9*Cin, C4))
    # b_ref   : (1, C4)  f32   conv bias
    # pool_ref: (bb, M)  f32   per-image spatial-mean matrix (1/HW on own rows)
    # grp_ref : (C4, C)  f32   r*r channel-group mean matrix (entries 1/(r*r))
    # grpe_ref: (C, C4)  f32   channel-group expand matrix (0/1)
    # w1/b1/w2/b2             squeeze-excite MLP params
    # o_ref   : (M, C4)  f32   attention-scaled conv output (still pre-shuffle)
    m, c4 = o_ref.shape
    bb = m // hw

    # Single MXU dot with K = 9*Cin; ReLU commutes with the pixel-shuffle permutation,
    # so it is applied here, pre-shuffle.
    y = jnp.dot(p_ref[...], w_ref[...], preferred_element_type=jnp.float32)
    y = jnp.maximum(y + b_ref[...], 0.0)                                     # (M, C4)

    # Global average pool of the (virtual) shuffled tensor, done as two small MXU
    # matmuls: spatial mean per image, then mean over each r*r channel group.
    gap_c4 = jnp.dot(pool_ref[...], y, preferred_element_type=jnp.float32)   # (bb, C4)
    gap = jnp.dot(gap_c4, grp_ref[...], preferred_element_type=jnp.float32)  # (bb, C)

    # Squeeze-excite MLP: Linear -> ReLU -> Linear -> sigmoid.
    h = jnp.maximum(
        jnp.dot(gap, w1_ref[...], preferred_element_type=jnp.float32) + b1_ref[...],
        0.0)
    att = jax.nn.sigmoid(
        jnp.dot(h, w2_ref[...], preferred_element_type=jnp.float32) + b2_ref[...])  # (bb, C)

    # Expand attention back to the pre-shuffle C4 channel layout and scale.
    att_c4 = jnp.dot(att, grpe_ref[...], preferred_element_type=jnp.float32)  # (bb, C4)
    o_ref[...] = (y.reshape(bb, hw, c4) * att_c4[:, None, :]).reshape(m, c4)


# ---------------------------------------------------------------------------
# Wrapper
# ---------------------------------------------------------------------------
def up_shuffle(x_nchw, params, scale=2):
    B, Cin, H, W = x_nchw.shape
    conv_w, conv_b = params["conv_w"], params["conv_b"]
    C4 = conv_w.shape[-1]
    r = scale
    C = C4 // (r * r)
    Chid = params["w1"].shape[1]
    HW = H * W
    K = 9 * Cin

    # --- im2col in the wrapper: lane-dense (B*H*W, 9*Cin) LHS for one dot per tile.
    x_nhwc = jnp.transpose(x_nchw, (0, 2, 3, 1))
    xp = jnp.pad(x_nhwc, ((0, 0), (1, 1), (1, 1), (0, 0)))
    taps = [xp[:, dy:dy + H, dx:dx + W, :] for dy in range(3) for dx in range(3)]
    patches = jnp.concatenate(taps, axis=-1).reshape(B * HW, K).astype(jnp.bfloat16)
    w_mat = conv_w.reshape(K, C4).astype(jnp.bfloat16)   # (ky,kx,cin) order matches taps

    # --- pick how many images share one tile (flatten batch into matmul M), keeping
    #     the VMEM footprint small and the sublane dim divisible by 8.
    bb = B
    budget = 8 << 20
    for d in range(B, 0, -1):
        if B % d == 0 and (d * HW) % 8 == 0:
            foot = d * HW * (2 * K + 8 * C4)   # bf16 patches + f32 y + f32 out
            if foot <= budget or d == 1:
                bb = d
                break
    grid = (B // bb,)
    M = bb * HW

    # Constant mixing matrices (spatial mean, r*r-group mean, group expand).
    pool = (jnp.arange(bb)[:, None] == (jnp.arange(M)[None, :] // HW)
            ).astype(jnp.float32) / HW                                   # (bb, M)
    grp_sel = (jnp.arange(C4)[:, None] // (r * r)) == jnp.arange(C)[None, :]
    grp = grp_sel.astype(jnp.float32) / (r * r)                          # (C4, C)
    grpe = grp_sel.T.astype(jnp.float32)                                 # (C, C4)

    out_flat = pl.pallas_call(
        functools.partial(_fused_upshuffle_kernel, HW),
        out_shape=jax.ShapeDtypeStruct((B * HW, C4), jnp.float32),
        grid_spec=pltpu.PrefetchScalarGridSpec(
            num_scalar_prefetch=0,
            grid=grid,
            in_specs=[
                pl.BlockSpec((M, K), lambda g: (g, 0)),        # patches
                pl.BlockSpec((K, C4), lambda g: (0, 0)),       # conv weights
                pl.BlockSpec((1, C4), lambda g: (0, 0)),       # conv bias
                pl.BlockSpec((bb, M), lambda g: (0, 0)),       # spatial-mean matrix
                pl.BlockSpec((C4, C), lambda g: (0, 0)),       # group-mean matrix
                pl.BlockSpec((C, C4), lambda g: (0, 0)),       # group-expand matrix
                pl.BlockSpec((C, Chid), lambda g: (0, 0)),     # w1
                pl.BlockSpec((1, Chid), lambda g: (0, 0)),     # b1
                pl.BlockSpec((Chid, C), lambda g: (0, 0)),     # w2
                pl.BlockSpec((1, C), lambda g: (0, 0)),        # b2
            ],
            out_specs=pl.BlockSpec((M, C4), lambda g: (g, 0)),
        ),
        compiler_params=pltpu.CompilerParams(dimension_semantics=("parallel",)),
    )(patches, w_mat, conv_b.reshape(1, C4).astype(jnp.float32),
      pool, grp, grpe,
      params["w1"], params["b1"].reshape(1, Chid),
      params["w2"], params["b2"].reshape(1, C))

    # Pixel shuffle + NCHW done ONCE at the very end as a single XLA permutation.
    # PyTorch PixelShuffle ordering: channel k = c*r*r + i*r + j -> out[c, h*r+i, w*r+j].
    Hs, Ws = H * r, W * r
    y = out_flat.reshape(B, H, W, C, r, r)
    return jnp.transpose(y, (0, 3, 1, 4, 2, 5)).reshape(B, C, Hs, Ws)


# ---------------------------------------------------------------------------
# Deterministic parameter init (synthetic; shapes from UpShuffle.__init__)
# ---------------------------------------------------------------------------
def init_params(key, in_chans, out_chans, scale=2, reduction=16):
    C4 = out_chans * scale * scale
    Chid = max(1, out_chans // reduction)   # guard degenerate hidden dim
    ks = jax.random.split(key, 6)
    return dict(
        conv_w=jax.random.normal(ks[0], (3, 3, in_chans, C4), jnp.float32) * 0.1,
        conv_b=jax.random.normal(ks[1], (C4,), jnp.float32) * 0.1,
        w1=jax.random.normal(ks[2], (out_chans, Chid), jnp.float32) * 0.1,
        b1=jax.random.normal(ks[3], (Chid,), jnp.float32) * 0.1,
        w2=jax.random.normal(ks[4], (Chid, out_chans), jnp.float32) * 0.1,
        b2=jax.random.normal(ks[5], (out_chans,), jnp.float32) * 0.1,
    )


# ---------------------------------------------------------------------------
# Pure-JAX f32 reference (same semantics as the PyTorch module, NCHW)
# ---------------------------------------------------------------------------
def up_shuffle_ref(x_nchw, params, scale=2):
    y = jax.lax.conv_general_dilated(
        x_nchw, params["conv_w"], (1, 1), "SAME",
        dimension_numbers=("NCHW", "HWIO", "NCHW"),
    ) + params["conv_b"][None, :, None, None]
    B, C4, H, W = y.shape
    C = C4 // (scale * scale)
    y = y.reshape(B, C, scale, scale, H, W)
    y = jnp.transpose(y, (0, 1, 4, 2, 5, 3)).reshape(B, C, H * scale, W * scale)
    y = jnp.maximum(y, 0.0)
    gap = jnp.mean(y, axis=(2, 3))                                 # (B, C)
    h = jnp.maximum(gap @ params["w1"] + params["b1"], 0.0)
    att = jax.nn.sigmoid(h @ params["w2"] + params["b2"])
    return y * att[:, :, None, None]


if __name__ == "__main__":
    # batch=2, in_chans=4, out_chans=32, spatial 8x8, scale=2, reduction=16.
    # Output is (2, 32, 16, 16); fused tile M = B*H*W = 128 rows, C4 = 128 lanes.
    key = jax.random.PRNGKey(0)
    k_x, k_p = jax.random.split(key)
    in_chans, out_chans, scale, reduction = 4, 32, 2, 16
    x = jax.random.normal(k_x, (2, in_chans, 8, 8), jnp.float32)
    params = init_params(k_p, in_chans, out_chans, scale, reduction)

    out = jax.block_until_ready(up_shuffle(x, params, scale))
    ref = jax.block_until_ready(up_shuffle_ref(x, params, scale))

    assert out.shape == ref.shape == (2, out_chans, 16, 16)
    # bf16 matmul operands (f32 accumulation) -> loosened tolerance vs f32 reference.
    assert jnp.allclose(out, ref, rtol=5e-2, atol=5e-2), "mismatch vs reference"

    print("KERNEL_OK")
</pallas_src>

<mosaic_0001>
module attributes {stable_mosaic.version = 11 : i64} {
  func.func @_fused_upshuffle_kernel(%arg0: i32, %arg1: memref<128x36xbf16, #tpu.memory_space<vmem>>, %arg2: memref<36x128xbf16, #tpu.memory_space<vmem>>, %arg3: memref<1x128xf32, #tpu.memory_space<vmem>>, %arg4: memref<2x128xf32, #tpu.memory_space<vmem>>, %arg5: memref<128x32xf32, #tpu.memory_space<vmem>>, %arg6: memref<32x128xf32, #tpu.memory_space<vmem>>, %arg7: memref<32x2xf32, #tpu.memory_space<vmem>>, %arg8: memref<1x2xf32, #tpu.memory_space<vmem>>, %arg9: memref<2x32xf32, #tpu.memory_space<vmem>>, %arg10: memref<1x32xf32, #tpu.memory_space<vmem>>, %arg11: memref<128x128xf32, #tpu.memory_space<vmem>>) attributes {dimension_semantics = [#tpu.dimension_semantics<parallel>], iteration_bounds = array<i64: 1>, scalar_prefetch = 0 : i64, scratch_operands = 0 : i64, tpu.core_type = #tpu.core_type<tc>, window_params = [{transform_indices = @transform_0, window_bounds = array<i64: 128, 36>}, {pipeline_mode = #tpu.pipeline_mode<synchronous>, transform_indices = @transform_1, window_bounds = array<i64: 36, 128>}, {pipeline_mode = #tpu.pipeline_mode<synchronous>, transform_indices = @transform_2, window_bounds = array<i64: 1, 128>}, {pipeline_mode = #tpu.pipeline_mode<synchronous>, transform_indices = @transform_3, window_bounds = array<i64: 2, 128>}, {pipeline_mode = #tpu.pipeline_mode<synchronous>, transform_indices = @transform_4, window_bounds = array<i64: 128, 32>}, {pipeline_mode = #tpu.pipeline_mode<synchronous>, transform_indices = @transform_5, window_bounds = array<i64: 32, 128>}, {pipeline_mode = #tpu.pipeline_mode<synchronous>, transform_indices = @transform_6, window_bounds = array<i64: 32, 2>}, {pipeline_mode = #tpu.pipeline_mode<synchronous>, transform_indices = @transform_7, window_bounds = array<i64: 1, 2>}, {pipeline_mode = #tpu.pipeline_mode<synchronous>, transform_indices = @transform_8, window_bounds = array<i64: 2, 32>}, {pipeline_mode = #tpu.pipeline_mode<synchronous>, transform_indices = @transform_9, window_bounds = array<i64: 1, 32>}, {transform_indices = @transform_10, window_bounds = array<i64: 128, 128>}]} {
    %c0 = arith.constant 0 : index
    %c0_0 = arith.constant 0 : index
    %0 = vector.load %arg1[%c0, %c0_0] : memref<128x36xbf16, #tpu.memory_space<vmem>>, vector<128x36xbf16>
    %c0_1 = arith.constant 0 : index
    %c0_2 = arith.constant 0 : index
    %1 = vector.load %arg2[%c0_1, %c0_2] : memref<36x128xbf16, #tpu.memory_space<vmem>>, vector<36x128xbf16>
    %cst = arith.constant dense<0.000000e+00> : vector<128x128xf32>
    %2 = tpu.matmul %0, %1, %cst {dimension_numbers = #tpu.dot_dimension_numbers<[1], [0], [0], [1], [0, 0, 1, 1], [], []>} : vector<128x36xbf16>, vector<36x128xbf16>, vector<128x128xf32> -> vector<128x128xf32>
    %c0_3 = arith.constant 0 : index
    %c0_4 = arith.constant 0 : index
    %3 = vector.load %arg3[%c0_3, %c0_4] : memref<1x128xf32, #tpu.memory_space<vmem>>, vector<1x128xf32>
    %4 = vector.broadcast %3 : vector<1x128xf32> to vector<128x128xf32>
    %5 = arith.addf %2, %4 : vector<128x128xf32>
    %cst_5 = arith.constant 0.000000e+00 : f32
    %6 = vector.broadcast %cst_5 : f32 to vector<128x128xf32>
    %7 = arith.maximumf %5, %6 : vector<128x128xf32>
    %c0_6 = arith.constant 0 : index
    %c0_7 = arith.constant 0 : index
    %8 = vector.load %arg4[%c0_6, %c0_7] : memref<2x128xf32, #tpu.memory_space<vmem>>, vector<2x128xf32>
    %cst_8 = arith.constant dense<0.000000e+00> : vector<2x128xf32>
    %9 = tpu.matmul %8, %7, %cst_8 {dimension_numbers = #tpu.dot_dimension_numbers<[1], [0], [0], [1], [0, 0, 1, 1], [], []>} : vector<2x128xf32>, vector<128x128xf32>, vector<2x128xf32> -> vector<2x128xf32>
    %c0_9 = arith.constant 0 : index
    %c0_10 = arith.constant 0 : index
    %10 = vector.load %arg5[%c0_9, %c0_10] : memref<128x32xf32, #tpu.memory_space<vmem>>, vector<128x32xf32>
    %cst_11 = arith.constant dense<0.000000e+00> : vector<2x32xf32>
    %11 = tpu.matmul %9, %10, %cst_11 {dimension_numbers = #tpu.dot_dimension_numbers<[1], [0], [0], [1], [0, 0, 1, 1], [], []>} : vector<2x128xf32>, vector<128x32xf32>, vector<2x32xf32> -> vector<2x32xf32>
    %c0_12 = arith.constant 0 : index
    %c0_13 = arith.constant 0 : index
    %12 = vector.load %arg7[%c0_12, %c0_13] : memref<32x2xf32, #tpu.memory_space<vmem>>, vector<32x2xf32>
    %cst_14 = arith.constant dense<0.000000e+00> : vector<2x2xf32>
    %13 = tpu.matmul %11, %12, %cst_14 {dimension_numbers = #tpu.dot_dimension_numbers<[1], [0], [0], [1], [0, 0, 1, 1], [], []>} : vector<2x32xf32>, vector<32x2xf32>, vector<2x2xf32> -> vector<2x2xf32>
    %c0_15 = arith.constant 0 : index
    %c0_16 = arith.constant 0 : index
    %14 = vector.load %arg8[%c0_15, %c0_16] : memref<1x2xf32, #tpu.memory_space<vmem>>, vector<1x2xf32>
    %15 = vector.broadcast %14 : vector<1x2xf32> to vector<2x2xf32>
    %16 = arith.addf %13, %15 : vector<2x2xf32>
    %cst_17 = arith.constant 0.000000e+00 : f32
    %17 = vector.broadcast %cst_17 : f32 to vector<2x2xf32>
    %18 = arith.maximumf %16, %17 : vector<2x2xf32>
    %c0_18 = arith.constant 0 : index
    %c0_19 = arith.constant 0 : index
    %19 = vector.load %arg9[%c0_18, %c0_19] : memref<2x32xf32, #tpu.memory_space<vmem>>, vector<2x32xf32>
    %cst_20 = arith.constant dense<0.000000e+00> : vector<2x32xf32>
    %20 = tpu.matmul %18, %19, %cst_20 {dimension_numbers = #tpu.dot_dimension_numbers<[1], [0], [0], [1], [0, 0, 1, 1], [], []>} : vector<2x2xf32>, vector<2x32xf32>, vector<2x32xf32> -> vector<2x32xf32>
    %c0_21 = arith.constant 0 : index
    %c0_22 = arith.constant 0 : index
    %21 = vector.load %arg10[%c0_21, %c0_22] : memref<1x32xf32, #tpu.memory_space<vmem>>, vector<1x32xf32>
    %22 = vector.broadcast %21 : vector<1x32xf32> to vector<2x32xf32>
    %23 = arith.addf %20, %22 : vector<2x32xf32>
    %24 = arith.negf %23 : vector<2x32xf32>
    %25 = math.exp %24 : vector<2x32xf32>
    %cst_23 = arith.constant 1.000000e+00 : f32
    %26 = vector.broadcast %cst_23 : f32 to vector<2x32xf32>
    %27 = arith.addf %26, %25 : vector<2x32xf32>
    %28 = arith.divf %26, %27 : vector<2x32xf32>
    %c0_24 = arith.constant 0 : index
    %c0_25 = arith.constant 0 : index
    %29 = vector.load %arg6[%c0_24, %c0_25] : memref<32x128xf32, #tpu.memory_space<vmem>>, vector<32x128xf32>
    %cst_26 = arith.constant dense<0.000000e+00> : vector<2x128xf32>
    %30 = tpu.matmul %28, %29, %cst_26 {dimension_numbers = #tpu.dot_dimension_numbers<[1], [0], [0], [1], [0, 0, 1, 1], [], []>} : vector<2x32xf32>, vector<32x128xf32>, vector<2x128xf32> -> vector<2x128xf32>
    %31 = vector.shape_cast %7 : vector<128x128xf32> to vector<2x64x128xf32>
    %32 = vector.shape_cast %30 : vector<2x128xf32> to vector<2x1x128xf32>
    %33 = vector.broadcast %32 : vector<2x1x128xf32> to vector<2x64x128xf32>
    %34 = arith.mulf %31, %33 : vector<2x64x128xf32>
    %35 = vector.shape_cast %34 : vector<2x64x128xf32> to vector<128x128xf32>
    %c0_27 = arith.constant 0 : index
    %c0_28 = arith.constant 0 : index
    %36 = vector.load %arg11[%c0_27, %c0_28] : memref<128x128xf32, #tpu.memory_space<vmem>>, vector<128x128xf32>
    tpu.vector_store %arg11[%c0_27, %c0_28], %35 {strides = array<i32>} : memref<128x128xf32, #tpu.memory_space<vmem>>, vector<128x128xf32>,
    return
  }
  func.func @transform_0(%arg0: i32) -> (i32, i32) {
    %c0_i32 = arith.constant 0 : i32
    %c0_i32_0 = arith.constant 0 : i32
    return %arg0, %c0_i32 : i32, i32
  }
  func.func @transform_1(%arg0: i32) -> (i32, i32) {
    %c0_i32 = arith.constant 0 : i32
    %c0_i32_0 = arith.constant 0 : i32
    %c0_i32_1 = arith.constant 0 : i32
    return %c0_i32, %c0_i32_0 : i32, i32
  }
  func.func @transform_2(%arg0: i32) -> (i32, i32) {
    %c0_i32 = arith.constant 0 : i32
    %c0_i32_0 = arith.constant 0 : i32
    %c0_i32_1 = arith.constant 0 : i32
    return %c0_i32, %c0_i32_0 : i32, i32
  }
  func.func @transform_3(%arg0: i32) -> (i32, i32) {
    %c0_i32 = arith.constant 0 : i32
    %c0_i32_0 = arith.constant 0 : i32
    %c0_i32_1 = arith.constant 0 : i32
    return %c0_i32, %c0_i32_0 : i32, i32
  }
  func.func @transform_4(%arg0: i32) -> (i32, i32) {
    %c0_i32 = arith.constant 0 : i32
    %c0_i32_0 = arith.constant 0 : i32
    %c0_i32_1 = arith.constant 0 : i32
    return %c0_i32, %c0_i32_0 : i32, i32
  }
  func.func @transform_5(%arg0: i32) -> (i32, i32) {
    %c0_i32 = arith.constant 0 : i32
    %c0_i32_0 = arith.constant 0 : i32
    %c0_i32_1 = arith.constant 0 : i32
    return %c0_i32, %c0_i32_0 : i32, i32
  }
  func.func @transform_6(%arg0: i32) -> (i32, i32) {
    %c0_i32 = arith.constant 0 : i32
    %c0_i32_0 = arith.constant 0 : i32
    %c0_i32_1 = arith.constant 0 : i32
    return %c0_i32, %c0_i32_0 : i32, i32
  }
  func.func @transform_7(%arg0: i32) -> (i32, i32) {
    %c0_i32 = arith.constant 0 : i32
    %c0_i32_0 = arith.constant 0 : i32
    %c0_i32_1 = arith.constant 0 : i32
    return %c0_i32, %c0_i32_0 : i32, i32
  }
  func.func @transform_8(%arg0: i32) -> (i32, i32) {
    %c0_i32 = arith.constant 0 : i32
    %c0_i32_0 = arith.constant 0 : i32
    %c0_i32_1 = arith.constant 0 : i32
    return %c0_i32, %c0_i32_0 : i32, i32
  }
  func.func @transform_9(%arg0: i32) -> (i32, i32) {
    %c0_i32 = arith.constant 0 : i32
    %c0_i32_0 = arith.constant 0 : i32
    %c0_i32_1 = arith.constant 0 : i32
    return %c0_i32, %c0_i32_0 : i32, i32
  }
  func.func @transform_10(%arg0: i32) -> (i32, i32) {
    %c0_i32 = arith.constant 0 : i32
    %c0_i32_0 = arith.constant 0 : i32
    return %arg0, %c0_i32 : i32, i32
  }
}

</mosaic_0001>

<llo_original>
// kernel: tpu_custom_call.1
$region0: #{tpu_custom_call.1}
  #allocation0 [shape = 'u32[]', space=smem, size = 0x4, offset = 0x4, fixed_abs, tag = 'smem constant byte address 0x4 - core index']
  #allocation1 [shape = 'u32[144,128]{1,0:T(1,128)}', space=vmem, size = 0x12000, scoped, tag = 'internal scratch']
  %s0 = inlined_call_operand.vmem [shape: bf16[128,36], index: 0, kind: input, shape index: {}]
  %s1 = inlined_call_operand.vmem [shape: bf16[36,128], index: 1, kind: input, shape index: {}]
  %s2 = inlined_call_operand.vmem [shape: f32[1,128], index: 2, kind: input, shape index: {}]
  %s3 = inlined_call_operand.vmem [shape: f32[2,128], index: 3, kind: input, shape index: {}]
  %s4 = inlined_call_operand.vmem [shape: f32[128,32], index: 4, kind: input, shape index: {}]
  %s5 = inlined_call_operand.vmem [shape: f32[32,128], index: 5, kind: input, shape index: {}]
  %s6 = inlined_call_operand.vmem [shape: f32[32,2], index: 6, kind: input, shape index: {}]
  %s7 = inlined_call_operand.vmem [shape: f32[1,2], index: 7, kind: input, shape index: {}]
  %s8 = inlined_call_operand.vmem [shape: f32[2,32], index: 8, kind: input, shape index: {}]
  %s9 = inlined_call_operand.vmem [shape: f32[1,32], index: 9, kind: input, shape index: {}]
  %s10 = inlined_call_operand.hbm [shape: f32[128,128], index: 10, kind: output, shape index: {}]
  %s11 = sld [smem:[#allocation0]]
  $region50: #{tpu_custom_call.1} parent=0
    _
  %s13 = ssub.s32 1, %s11
  %s14 = scalar_select 0, %s13, %s11
  $region1: #{tpu_custom_call.1} parent=0
    #allocation2 [shape = 'u8[65536]{0}', space=vmem, size = 0x10000, scoped, tag = 'output window, operand 0, single buffered']
    #allocation3 [shape = 's32[1]{0}', space=sflag, size = 0x4, scoped, tag = 'scoped memory for tpu_custom_call.1']
    %15 = vsyncpa [#allocation3], 0
    // Predicated region
    $region2: #{tpu_custom_call.1} parent=1 // pred_check
      _
    $region3: #{tpu_custom_call.1} parent=1 // pred_check_branch
      %17 = sbr.rel (0) target = $region5
    $region4: #{tpu_custom_call.1} parent=1 // pred_region
      _
    $region5: #{tpu_custom_call.1} parent=1 // pred_fallthru
      _
    // Predicated region
    $region6: #{tpu_custom_call.1} parent=1 // pred_check
      _
    $region7: #{tpu_custom_call.1} parent=1 // pred_check_branch
      %19 = sbr.rel (0) target = $region9
    $region8: #{tpu_custom_call.1} parent=1 // pred_region
      _
    $region9: #{tpu_custom_call.1} parent=1 // pred_fallthru
      _
    // Predicated region
    $region10: #{tpu_custom_call.1} parent=1 // pred_check
      _
    $region11: #{tpu_custom_call.1} parent=1 // pred_check_branch
      %21 = sbr.rel (0) target = $region13
    $region12: #{tpu_custom_call.1} parent=1 // pred_region
      _
    $region13: #{tpu_custom_call.1} parent=1 // pred_fallthru
      _
    // Predicated region
    $region14: #{tpu_custom_call.1} parent=1 // pred_check
      _
    $region15: #{tpu_custom_call.1} parent=1 // pred_check_branch
      %23 = sbr.rel (0) target = $region17
    $region16: #{tpu_custom_call.1} parent=1 // pred_region
      _
    $region17: #{tpu_custom_call.1} parent=1 // pred_fallthru
      _
    // Predicated region
    $region18: #{tpu_custom_call.1} parent=1 // pred_check
      _
    $region19: #{tpu_custom_call.1} parent=1 // pred_check_branch
      %25 = sbr.rel (0) target = $region21
    $region20: #{tpu_custom_call.1} parent=1 // pred_region
      _
    $region21: #{tpu_custom_call.1} parent=1 // pred_fallthru
      _
    // Predicated region
    $region22: #{tpu_custom_call.1} parent=1 // pred_check
      _
    $region23: #{tpu_custom_call.1} parent=1 // pred_check_branch
      %27 = sbr.rel (0) target = $region25
    $region24: #{tpu_custom_call.1} parent=1 // pred_region
      _
    $region25: #{tpu_custom_call.1} parent=1 // pred_fallthru
      _
    // Predicated region
    $region26: #{tpu_custom_call.1} parent=1 // pred_check
      _
    $region27: #{tpu_custom_call.1} parent=1 // pred_check_branch
      %29 = sbr.rel (0) target = $region29
    $region28: #{tpu_custom_call.1} parent=1 // pred_region
      _
    $region29: #{tpu_custom_call.1} parent=1 // pred_fallthru
      _
    // Predicated region
    $region30: #{tpu_custom_call.1} parent=1 // pred_check
      _
    $region31: #{tpu_custom_call.1} parent=1 // pred_check_branch
      %31 = sbr.rel (0) target = $region33
    $region32: #{tpu_custom_call.1} parent=1 // pred_region
      _
    $region33: #{tpu_custom_call.1} parent=1 // pred_fallthru
      _
    // Predicated region
    $region34: #{tpu_custom_call.1} parent=1 // pred_check
      _
    $region35: #{tpu_custom_call.1} parent=1 // pred_check_branch
      %33 = sbr.rel (0) target = $region37
    $region36: #{tpu_custom_call.1} parent=1 // pred_region
      _
    $region37: #{tpu_custom_call.1} parent=1 // pred_fallthru
      _
    // Predicated region
    $region38: #{tpu_custom_call.1} parent=1 // pred_check
      _
    $region39: #{tpu_custom_call.1} parent=1 // pred_check_branch
      %35 = sbr.rel (0) target = $region41
    $region40: #{tpu_custom_call.1} parent=1 // pred_region
      _
    $region41: #{tpu_custom_call.1} parent=1 // pred_fallthru
      _
    %v37 = vld [vmem:[%s0] sm:$0xf]
    %v38 = vld [vmem:[%s0 + $0x4] sm:$0xf]
    %v39 = vld [vmem:[%s0 + $0x8] sm:$0xf]
    %v40 = vld [vmem:[%s0 + $0xc] sm:$0xf]
    %v41 = vld [vmem:[%s0 + $0x10] sm:$0xf]
    %v42 = vld [vmem:[%s0 + $0x14] sm:$0xf]
    %v43 = vld [vmem:[%s0 + $0x18] sm:$0xf]
    %v44 = vld [vmem:[%s0 + $0x1c] sm:$0xf]
    %v45 = vld [vmem:[%s0 + $0x20] sm:$0xf]
    %v46 = vld [vmem:[%s0 + $0x24] sm:$0xf]
    %v47 = vld [vmem:[%s0 + $0x28] sm:$0xf]
    %v48 = vld [vmem:[%s0 + $0x2c] sm:$0xf]
    %v49 = vld [vmem:[%s0 + $0x30] sm:$0xf]
    %v50 = vld [vmem:[%s0 + $0x34] sm:$0xf]
    %v51 = vld [vmem:[%s0 + $0x38] sm:$0xf]
    %v52 = vld [vmem:[%s0 + $0x3c] sm:$0xf]
    %v53 = vld [vmem:[%s1] sm:$0xf]
    %v54 = vld [vmem:[%s1 + $0x4] sm:$0xf]
    %v55 = vld [vmem:[%s1 + $0x8] sm:$0xf]
    %v56 = vld [vmem:[%s1 + $0xc] sm:$0xf]
    %v57 = vld [vmem:[%s1 + $0x10] sm:$0x3]
    %v58 = vld [vmem:[%s2] sm:$0x1]
    %v60 = vlaneseq
    %v61 = vshrl.u32 %v60, 7
    %v62 = vsub.s32 0, %v61
    %v63 = vrot.slane %v58, %v62
    %v81 = vunpack.c.l.b16 %v37
    %v82 = vunpack.c.l.b16 %v38
    %v83 = vunpack.c.l.b16 %v39
    %v84 = vunpack.c.l.b16 %v40
    %v85 = vunpack.c.l.b16 %v41
    %v86 = vunpack.c.l.b16 %v42
    %v87 = vunpack.c.l.b16 %v43
    %v88 = vunpack.c.l.b16 %v44
    %v89 = vunpack.c.l.b16 %v45
    %v90 = vunpack.c.l.b16 %v46
    %v91 = vunpack.c.l.b16 %v47
    %v92 = vunpack.c.l.b16 %v48
    %v93 = vunpack.c.l.b16 %v49
    %v94 = vunpack.c.l.b16 %v50
    %v95 = vunpack.c.l.b16 %v51
    %v96 = vunpack.c.l.b16 %v52
    %v97 = vpack.c.b16 %v82, %v81
    %v98 = vpack.c.b16 %v84, %v83
    %v99 = vpack.c.b16 %v86, %v85
    %v100 = vpack.c.b16 %v88, %v87
    %v101 = vpack.c.b16 %v90, %v89
    %v102 = vpack.c.b16 %v92, %v91
    %v103 = vpack.c.b16 %v94, %v93
    %v104 = vpack.c.b16 %v96, %v95
    %v110 = vunpack.c.l.b16 %v53
    %v111 = vunpack.c.l.b16 %v54
    %v112 = vunpack.c.l.b16 %v55
    %v113 = vunpack.c.l.b16 %v56
    %v114 = vunpack.c.l.b16 %v57
    %v115 = vpack.c.b16 %v111, %v110
    %v116 = vpack.c.b16 %v113, %v112
    %v117 = vpack.c.b16 %v114, %v114
    %vm120 = vcmask 293888
    %v122 = vsel %vm120, %v97, 0
    %v125 = vsel %vm120, %v98, 0
    %v128 = vsel %vm120, %v99, 0
    %v131 = vsel %vm120, %v100, 0
    %v134 = vsel %vm120, %v101, 0
    %v137 = vsel %vm120, %v102, 0
    %v140 = vsel %vm120, %v103, 0
    %v143 = vsel %vm120, %v104, 0
    %vm145 = vcmask 1041408
    %v147 = vsel %vm145, %v117, 0
    %149 = vmatprep.subr.bf16.mxu0 0
    %150 = vmatpush1.bf16.msra.mxu0 %v115
    %151 = vmatprep.subr.bf16.mxu0 0
    %152 = vmatpush1.bf16.msra.mxu0 %v116
    %153 = vmatprep.subr.bf16.mxu0 0
    %154 = vmatpush1.bf16.msra.mxu0 %v147
    %155 = vmatprep.subr.bf16.mxu0 0
    %156 = vmatpush1.bf16.msra.mxu0 0
    %157 = vmatprep.subr.bf16.mxu0 0
    %158 = vmatpush1.bf16.msra.mxu0 0
    %159 = vmatprep.subr.bf16.mxu0 0
    %160 = vmatpush1.bf16.msra.mxu0 0
    %161 = vmatprep.subr.bf16.mxu0 0
    %162 = vmatpush1.bf16.msra.mxu0 0
    %163 = vmatprep.subr.bf16.mxu0 0
    %164 = vmatpush1.bf16.msra.mxu0 0
    %165 = vmatprep.subr.bf16.mxu0 0
    %166 = vmatpush1.bf16.msra.mxu0 0
    %167 = vmatprep.subr.bf16.mxu0 0
    %168 = vmatpush1.bf16.msra.mxu0 0
    %169 = vmatprep.subr.bf16.mxu0 0
    %170 = vmatpush1.bf16.msra.mxu0 0
    %171 = vmatprep.subr.bf16.mxu0 0
    %172 = vmatpush1.bf16.msra.mxu0 0
    %173 = vmatprep.subr.bf16.mxu0 0
    %174 = vmatpush1.bf16.msra.mxu0 0
    %175 = vmatprep.subr.bf16.mxu0 0
    %176 = vmatpush1.bf16.msra.mxu0 0
    %177 = vmatprep.subr.bf16.mxu0 0
    %178 = vmatpush1.bf16.msra.mxu0 0
    %179 = vmatprep.subr.bf16.mxu0 0
    %180 = vmatpush1.bf16.msra.mxu0 0
    %181 = vmatprep.mubr.bf16.mxu0 0
    %182 = vmatmul.mubr.bf16.gmra.mrb[0].mxu0 %v122
    %v183 = vpop.f32.mrb[0].mxu0
    %v184 = vadd.f32 %v63, %v183
    %v185 = vpop.f32.mrb[0].mxu0
    %v186 = vpop.f32.mrb[0].mxu0
    %v187 = vadd.f32 %v63, %v186
    %v188 = vpop.f32.mrb[0].mxu0
    %189 = vmatprep.mubr.bf16.mxu0 0
    %190 = vmatmul.mubr.bf16.gmra.mrb[0].mxu0 %v125
    %v191 = vpop.f32.mrb[0].mxu0
    %v192 = vadd.f32 %v63, %v191
    %v193 = vpop.f32.mrb[0].mxu0
    %v194 = vpop.f32.mrb[0].mxu0
    %v195 = vadd.f32 %v63, %v194
    %v196 = vpop.f32.mrb[0].mxu0
    %197 = vmatprep.mubr.bf16.mxu0 0
    %198 = vmatmul.mubr.bf16.gmra.mrb[0].mxu0 %v128
    %v199 = vpop.f32.mrb[0].mxu0
    %v200 = vadd.f32 %v63, %v199
    %v201 = vpop.f32.mrb[0].mxu0
    %v202 = vpop.f32.mrb[0].mxu0
    %v203 = vadd.f32 %v63, %v202
    %v204 = vpop.f32.mrb[0].mxu0
    %205 = vmatprep.mubr.bf16.mxu0 0
    %206 = vmatmul.mubr.bf16.gmra.mrb[0].mxu0 %v131
    %v207 = vpop.f32.mrb[0].mxu0
    %v208 = vadd.f32 %v63, %v207
    %v209 = vpop.f32.mrb[0].mxu0
    %v210 = vpop.f32.mrb[0].mxu0
    %v211 = vadd.f32 %v63, %v210
    %v212 = vpop.f32.mrb[0].mxu0
    %213 = vmatprep.mubr.bf16.mxu0 0
    %214 = vmatmul.mubr.bf16.gmra.mrb[0].mxu0 %v134
    %v215 = vpop.f32.mrb[0].mxu0
    %v216 = vadd.f32 %v63, %v215
    %v217 = vpop.f32.mrb[0].mxu0
    %v218 = vpop.f32.mrb[0].mxu0
    %v219 = vadd.f32 %v63, %v218
    %v220 = vpop.f32.mrb[0].mxu0
    %221 = vmatprep.mubr.bf16.mxu0 0
    %222 = vmatmul.mubr.bf16.gmra.mrb[0].mxu0 %v137
    %v223 = vpop.f32.mrb[0].mxu0
    %v224 = vadd.f32 %v63, %v223
    %v225 = vpop.f32.mrb[0].mxu0
    %v226 = vpop.f32.mrb[0].mxu0
    %v227 = vadd.f32 %v63, %v226
    %v228 = vpop.f32.mrb[0].mxu0
    %229 = vmatprep.mubr.bf16.mxu0 0
    %230 = vmatmul.mubr.bf16.gmra.mrb[0].mxu0 %v140
    %v231 = vpop.f32.mrb[0].mxu0
    %v232 = vadd.f32 %v63, %v231
    %v233 = vpop.f32.mrb[0].mxu0
    %v234 = vpop.f32.mrb[0].mxu0
    %v235 = vadd.f32 %v63, %v234
    %v236 = vpop.f32.mrb[0].mxu0
    %237 = vmatprep.mubr.bf16.mxu0 0
    %238 = vmatmul.mubr.bf16.gmra.mrb[0].mxu0 %v143
    %v239 = vpop.f32.mrb[0].mxu0
    %v240 = vadd.f32 %v63, %v239
    %v241 = vpop.f32.mrb[0].mxu0
    %v242 = vpop.f32.mrb[0].mxu0
    %v243 = vadd.f32 %v63, %v242
    %v244 = vpop.f32.mrb[0].mxu0
    %245 = vdwg.mxu0
    %v246 = vmax.f32 %v184, 0.0
    %v247 = vmax.f32 %v187, 0.0
    %v248 = vmax.f32 %v192, 0.0
    %v249 = vmax.f32 %v195, 0.0
    %v250 = vmax.f32 %v200, 0.0
    %v251 = vmax.f32 %v203, 0.0
    %v252 = vmax.f32 %v208, 0.0
    %v253 = vmax.f32 %v211, 0.0
    %v254 = vmax.f32 %v216, 0.0
    %v255 = vmax.f32 %v219, 0.0
    %v256 = vmax.f32 %v224, 0.0
    %v257 = vmax.f32 %v227, 0.0
    %v258 = vmax.f32 %v232, 0.0
    %v259 = vmax.f32 %v235, 0.0
    %v260 = vmax.f32 %v240, 0.0
    %v261 = vmax.f32 %v243, 0.0
    %v262 = vld [vmem:[%s3] sm:$0x3]
    %263 = vmatprep.subr.mxu0 0.0
    %264 = vmatpush1.msra.mxu0 %v246
    %265 = vmatprep.subr.mxu0 0.0
    %266 = vmatpush1.msra.mxu0 %v247
    %267 = vmatprep.subr.mxu0 0.0
    %268 = vmatpush1.msra.mxu0 %v248
    %269 = vmatprep.subr.mxu0 0.0
    %270 = vmatpush1.msra.mxu0 %v249
    %271 = vmatprep.subr.mxu0 0.0
    %272 = vmatpush1.msra.mxu0 %v250
    %273 = vmatprep.subr.mxu0 0.0
    %274 = vmatpush1.msra.mxu0 %v251
    %275 = vmatprep.subr.mxu0 0.0
    %276 = vmatpush1.msra.mxu0 %v252
    %277 = vmatprep.subr.mxu0 0.0
    %278 = vmatpush1.msra.mxu0 %v253
    %279 = vmatprep.subr.mxu0 0.0
    %280 = vmatpush1.msra.mxu0 %v254
    %281 = vmatprep.subr.mxu0 0.0
    %282 = vmatpush1.msra.mxu0 %v255
    %283 = vmatprep.subr.mxu0 0.0
    %284 = vmatpush1.msra.mxu0 %v256
    %285 = vmatprep.subr.mxu0 0.0
    %286 = vmatpush1.msra.mxu0 %v257
    %287 = vmatprep.subr.mxu0 0.0
    %288 = vmatpush1.msra.mxu0 %v258
    %289 = vmatprep.subr.mxu0 0.0
    %290 = vmatpush1.msra.mxu0 %v259
    %291 = vmatprep.subr.mxu0 0.0
    %292 = vmatpush1.msra.mxu0 %v260
    %293 = vmatprep.subr.mxu0 0.0
    %294 = vmatpush1.msra.mxu0 %v261
    %295 = vmatprep.subr.mxu0 0.0
    %296 = vmatpush1.msra.mxu0 0.0
    %297 = vmatprep.subr.mxu0 0.0
    %298 = vmatpush1.msra.mxu0 0.0
    %299 = vmatprep.subr.mxu0 0.0
    %300 = vmatpush1.msra.mxu0 0.0
    %301 = vmatprep.subr.mxu0 0.0
    %302 = vmatpush1.msra.mxu0 0.0
    %303 = vmatprep.subr.mxu0 0.0
    %304 = vmatpush1.msra.mxu0 0.0
    %305 = vmatprep.subr.mxu0 0.0
    %306 = vmatpush1.msra.mxu0 0.0
    %307 = vmatprep.subr.mxu0 0.0
    %308 = vmatpush1.msra.mxu0 0.0
    %309 = vmatprep.subr.mxu0 0.0
    %310 = vmatpush1.msra.mxu0 0.0
    %311 = vmatprep.subr.mxu0 0.0
    %312 = vmatpush1.msra.mxu0 0.0
    %313 = vmatprep.subr.mxu0 0.0
    %314 = vmatpush1.msra.mxu0 0.0
    %315 = vmatprep.subr.mxu0 0.0
    %316 = vmatpush1.msra.mxu0 0.0
    %317 = vmatprep.subr.mxu0 0.0
    %318 = vmatpush1.msra.mxu0 0.0
    %319 = vmatprep.subr.mxu0 0.0
    %320 = vmatpush1.msra.mxu0 0.0
    %321 = vmatprep.subr.mxu0 0.0
    %322 = vmatpush1.msra.mxu0 0.0
    %323 = vmatprep.subr.mxu0 0.0
    %324 = vmatpush1.msra.mxu0 0.0
    %325 = vmatprep.subr.mxu0 0.0
    %326 = vmatpush1.msra.mxu0 0.0
    %327 = vmatprep.mubr.f32.mxu0 0.0
    %328 = vmatmul.mubr.f32.gmra.mrb[0].mxu0 %v262
    %v329 = vpop.f32.mrb[0].mxu0
    %v330 = vadd.f32 0.0, %v329
    %v331 = vpop.f32.mrb[0].mxu0
    %332 = vdwg.mxu0
    %v333 = vld [vmem:[%s4] sm:$0xff]
    %v334 = vld [vmem:[%s4 + $0x8] sm:$0xff]
    %v335 = vld [vmem:[%s4 + $0x10] sm:$0xff]
    %v336 = vld [vmem:[%s4 + $0x18] sm:$0xff]
    %v337 = vld [vmem:[%s4 + $0x20] sm:$0xff]
    %v338 = vld [vmem:[%s4 + $0x28] sm:$0xff]
    %v339 = vld [vmem:[%s4 + $0x30] sm:$0xff]
    %v340 = vld [vmem:[%s4 + $0x38] sm:$0xff]
    %v341 = vld [vmem:[%s4 + $0x40] sm:$0xff]
    %v342 = vld [vmem:[%s4 + $0x48] sm:$0xff]
    %v343 = vld [vmem:[%s4 + $0x50] sm:$0xff]
    %v344 = vld [vmem:[%s4 + $0x58] sm:$0xff]
    %v345 = vld [vmem:[%s4 + $0x60] sm:$0xff]
    %v346 = vld [vmem:[%s4 + $0x68] sm:$0xff]
    %v347 = vld [vmem:[%s4 + $0x70] sm:$0xff]
    %v348 = vld [vmem:[%s4 + $0x78] sm:$0xff]
    %349 = vmatprep.subr.mxu0 0.0
    %350 = vmatpush1.msra.mxu0 %v333
    %351 = vmatprep.subr.mxu0 0.0
    %352 = vmatpush1.msra.mxu0 %v334
    %353 = vmatprep.subr.mxu0 0.0
    %354 = vmatpush1.msra.mxu0 %v335
    %355 = vmatprep.subr.mxu0 0.0
    %356 = vmatpush1.msra.mxu0 %v336
    %357 = vmatprep.subr.mxu0 0.0
    %358 = vmatpush1.msra.mxu0 %v337
    %359 = vmatprep.subr.mxu0 0.0
    %360 = vmatpush1.msra.mxu0 %v338
    %361 = vmatprep.subr.mxu0 0.0
    %362 = vmatpush1.msra.mxu0 %v339
    %363 = vmatprep.subr.mxu0 0.0
    %364 = vmatpush1.msra.mxu0 %v340
    %365 = vmatprep.subr.mxu0 0.0
    %366 = vmatpush1.msra.mxu0 %v341
    %367 = vmatprep.subr.mxu0 0.0
    %368 = vmatpush1.msra.mxu0 %v342
    %369 = vmatprep.subr.mxu0 0.0
    %370 = vmatpush1.msra.mxu0 %v343
    %371 = vmatprep.subr.mxu0 0.0
    %372 = vmatpush1.msra.mxu0 %v344
    %373 = vmatprep.subr.mxu0 0.0
    %374 = vmatpush1.msra.mxu0 %v345
    %375 = vmatprep.subr.mxu0 0.0
    %376 = vmatpush1.msra.mxu0 %v346
    %377 = vmatprep.subr.mxu0 0.0
    %378 = vmatpush1.msra.mxu0 %v347
    %379 = vmatprep.subr.mxu0 0.0
    %380 = vmatpush1.msra.mxu0 %v348
    %381 = vmatprep.subr.mxu0 0.0
    %382 = vmatpush1.msra.mxu0 0.0
    %383 = vmatprep.subr.mxu0 0.0
    %384 = vmatpush1.msra.mxu0 0.0
    %385 = vmatprep.subr.mxu0 0.0
    %386 = vmatpush1.msra.mxu0 0.0
    %387 = vmatprep.subr.mxu0 0.0
    %388 = vmatpush1.msra.mxu0 0.0
    %389 = vmatprep.subr.mxu0 0.0
    %390 = vmatpush1.msra.mxu0 0.0
    %391 = vmatprep.subr.mxu0 0.0
    %392 = vmatpush1.msra.mxu0 0.0
    %393 = vmatprep.subr.mxu0 0.0
    %394 = vmatpush1.msra.mxu0 0.0
    %395 = vmatprep.subr.mxu0 0.0
    %396 = vmatpush1.msra.mxu0 0.0
    %397 = vmatprep.subr.mxu0 0.0
    %398 = vmatpush1.msra.mxu0 0.0
    %399 = vmatprep.subr.mxu0 0.0
    %400 = vmatpush1.msra.mxu0 0.0
    %401 = vmatprep.subr.mxu0 0.0
    %402 = vmatpush1.msra.mxu0 0.0
    %403 = vmatprep.subr.mxu0 0.0
    %404 = vmatpush1.msra.mxu0 0.0
    %405 = vmatprep.subr.mxu0 0.0
    %406 = vmatpush1.msra.mxu0 0.0
    %407 = vmatprep.subr.mxu0 0.0
    %408 = vmatpush1.msra.mxu0 0.0
    %409 = vmatprep.subr.mxu0 0.0
    %410 = vmatpush1.msra.mxu0 0.0
    %411 = vmatprep.subr.mxu0 0.0
    %412 = vmatpush1.msra.mxu0 0.0
    %413 = vmatprep.mubr.f32.mxu0 0.0
    %414 = vmatmul.mubr.f32.gmra.mrb[0].mxu0 %v330
    %v415 = vpop.f32.mrb[0].mxu0
    %v416 = vadd.f32 0.0, %v415
    %v417 = vpop.f32.mrb[0].mxu0
    %418 = vdwg.mxu0
    %v419 = vld [vmem:[%s6] sm:$0xff]
    %v420 = vld [vmem:[%s6 + $0x8] sm:$0xff]
    %v421 = vld [vmem:[%s6 + $0x10] sm:$0xff]
    %v422 = vld [vmem:[%s6 + $0x18] sm:$0xff]
    %v423 = vld [vmem:[%s7] sm:$0x1]
    %v425 = vlaneseq
    %v426 = vshrl.u32 %v425, 7
    %v427 = vsub.s32 0, %v426
    %v428 = vrot.slane %v423, %v427
    %vm430 = vcmask 261120
    %v432 = vsel %vm430, %v416, 0
    %434 = vmatprep.subr.mxu0 0.0
    %435 = vmatpush1.msra.mxu0 %v419
    %436 = vmatprep.subr.mxu0 0.0
    %437 = vmatpush1.msra.mxu0 %v420
    %438 = vmatprep.subr.mxu0 0.0
    %439 = vmatpush1.msra.mxu0 %v421
    %440 = vmatprep.subr.mxu0 0.0
    %441 = vmatpush1.msra.mxu0 %v422
    %442 = vmatprep.subr.mxu0 0.0
    %443 = vmatpush1.msra.mxu0 0.0
    %444 = vmatprep.subr.mxu0 0.0
    %445 = vmatpush1.msra.mxu0 0.0
    %446 = vmatprep.subr.mxu0 0.0
    %447 = vmatpush1.msra.mxu0 0.0
    %448 = vmatprep.subr.mxu0 0.0
    %449 = vmatpush1.msra.mxu0 0.0
    %450 = vmatprep.subr.mxu0 0.0
    %451 = vmatpush1.msra.mxu0 0.0
    %452 = vmatprep.subr.mxu0 0.0
    %453 = vmatpush1.msra.mxu0 0.0
    %454 = vmatprep.subr.mxu0 0.0
    %455 = vmatpush1.msra.mxu0 0.0
    %456 = vmatprep.subr.mxu0 0.0
    %457 = vmatpush1.msra.mxu0 0.0
    %458 = vmatprep.subr.mxu0 0.0
    %459 = vmatpush1.msra.mxu0 0.0
    %460 = vmatprep.subr.mxu0 0.0
    %461 = vmatpush1.msra.mxu0 0.0
    %462 = vmatprep.subr.mxu0 0.0
    %463 = vmatpush1.msra.mxu0 0.0
    %464 = vmatprep.subr.mxu0 0.0
    %465 = vmatpush1.msra.mxu0 0.0
    %466 = vmatprep.subr.mxu0 0.0
    %467 = vmatpush1.msra.mxu0 0.0
    %468 = vmatprep.subr.mxu0 0.0
    %469 = vmatpush1.msra.mxu0 0.0
    %470 = vmatprep.subr.mxu0 0.0
    %471 = vmatpush1.msra.mxu0 0.0
    %472 = vmatprep.subr.mxu0 0.0
    %473 = vmatpush1.msra.mxu0 0.0
    %474 = vmatprep.subr.mxu0 0.0
    %475 = vmatpush1.msra.mxu0 0.0
    %476 = vmatprep.subr.mxu0 0.0
    %477 = vmatpush1.msra.mxu0 0.0
    %478 = vmatprep.subr.mxu0 0.0
    %479 = vmatpush1.msra.mxu0 0.0
    %480 = vmatprep.subr.mxu0 0.0
    %481 = vmatpush1.msra.mxu0 0.0
    %482 = vmatprep.subr.mxu0 0.0
    %483 = vmatpush1.msra.mxu0 0.0
    %484 = vmatprep.subr.mxu0 0.0
    %485 = vmatpush1.msra.mxu0 0.0
    %486 = vmatprep.subr.mxu0 0.0
    %487 = vmatpush1.msra.mxu0 0.0
    %488 = vmatprep.subr.mxu0 0.0
    %489 = vmatpush1.msra.mxu0 0.0
    %490 = vmatprep.subr.mxu0 0.0
    %491 = vmatpush1.msra.mxu0 0.0
    %492 = vmatprep.subr.mxu0 0.0
    %493 = vmatpush1.msra.mxu0 0.0
    %494 = vmatprep.subr.mxu0 0.0
    %495 = vmatpush1.msra.mxu0 0.0
    %496 = vmatprep.subr.mxu0 0.0
    %497 = vmatpush1.msra.mxu0 0.0
    %498 = vmatprep.mubr.f32.mxu0 0.0
    %499 = vmatmul.mubr.f32.gmra.mrb[0].mxu0 %v432
    %v500 = vpop.f32.mrb[0].mxu0
    %v501 = vadd.f32 %v428, %v500
    %v502 = vpop.f32.mrb[0].mxu0
    %503 = vdwg.mxu0
    %v504 = vmax.f32 %v501, 0.0
    %v505 = vld [vmem:[%s8] sm:$0x3]
    %v506 = vld [vmem:[%s9] sm:$0x1]
    %v508 = vlaneseq
    %v509 = vshrl.u32 %v508, 7
    %v510 = vsub.s32 0, %v509
    %v511 = vrot.slane %v506, %v510
    %vm513 = vcmask 15360
    %v515 = vsel %vm513, %v504, 0
    %v518 = vsel %vm145, %v505, 0
    %520 = vmatprep.subr.mxu0 0.0
    %521 = vmatpush1.msra.mxu0 %v518
    %522 = vmatprep.subr.mxu0 0.0
    %523 = vmatpush1.msra.mxu0 0.0
    %524 = vmatprep.subr.mxu0 0.0
    %525 = vmatpush1.msra.mxu0 0.0
    %526 = vmatprep.subr.mxu0 0.0
    %527 = vmatpush1.msra.mxu0 0.0
    %528 = vmatprep.subr.mxu0 0.0
    %529 = vmatpush1.msra.mxu0 0.0
    %530 = vmatprep.subr.mxu0 0.0
    %531 = vmatpush1.msra.mxu0 0.0
    %532 = vmatprep.subr.mxu0 0.0
    %533 = vmatpush1.msra.mxu0 0.0
    %534 = vmatprep.subr.mxu0 0.0
    %535 = vmatpush1.msra.mxu0 0.0
    %536 = vmatprep.subr.mxu0 0.0
    %537 = vmatpush1.msra.mxu0 0.0
    %538 = vmatprep.subr.mxu0 0.0
    %539 = vmatpush1.msra.mxu0 0.0
    %540 = vmatprep.subr.mxu0 0.0
    %541 = vmatpush1.msra.mxu0 0.0
    %542 = vmatprep.subr.mxu0 0.0
    %543 = vmatpush1.msra.mxu0 0.0
    %544 = vmatprep.subr.mxu0 0.0
    %545 = vmatpush1.msra.mxu0 0.0
    %546 = vmatprep.subr.mxu0 0.0
    %547 = vmatpush1.msra.mxu0 0.0
    %548 = vmatprep.subr.mxu0 0.0
    %549 = vmatpush1.msra.mxu0 0.0
    %550 = vmatprep.subr.mxu0 0.0
    %551 = vmatpush1.msra.mxu0 0.0
    %552 = vmatprep.subr.mxu0 0.0
    %553 = vmatpush1.msra.mxu0 0.0
    %554 = vmatprep.subr.mxu0 0.0
    %555 = vmatpush1.msra.mxu0 0.0
    %556 = vmatprep.subr.mxu0 0.0
    %557 = vmatpush1.msra.mxu0 0.0
    %558 = vmatprep.subr.mxu0 0.0
    %559 = vmatpush1.msra.mxu0 0.0
    %560 = vmatprep.subr.mxu0 0.0
    %561 = vmatpush1.msra.mxu0 0.0
    %562 = vmatprep.subr.mxu0 0.0
    %563 = vmatpush1.msra.mxu0 0.0
    %564 = vmatprep.subr.mxu0 0.0
    %565 = vmatpush1.msra.mxu0 0.0
    %566 = vmatprep.subr.mxu0 0.0
    %567 = vmatpush1.msra.mxu0 0.0
    %568 = vmatprep.subr.mxu0 0.0
    %569 = vmatpush1.msra.mxu0 0.0
    %570 = vmatprep.subr.mxu0 0.0
    %571 = vmatpush1.msra.mxu0 0.0
    %572 = vmatprep.subr.mxu0 0.0
    %573 = vmatpush1.msra.mxu0 0.0
    %574 = vmatprep.subr.mxu0 0.0
    %575 = vmatpush1.msra.mxu0 0.0
    %576 = vmatprep.subr.mxu0 0.0
    %577 = vmatpush1.msra.mxu0 0.0
    %578 = vmatprep.subr.mxu0 0.0
    %579 = vmatpush1.msra.mxu0 0.0
    %580 = vmatprep.subr.mxu0 0.0
    %581 = vmatpush1.msra.mxu0 0.0
    %582 = vmatprep.subr.mxu0 0.0
    %583 = vmatpush1.msra.mxu0 0.0
    %584 = vmatprep.mubr.f32.mxu0 0.0
    %585 = vmatmul.mubr.f32.gmra.mrb[0].mxu0 %v515
    %v586 = vpop.f32.mrb[0].mxu0
    %v587 = vadd.f32 %v511, %v586
    %v588 = vpop.f32.mrb[0].mxu0
    %589 = vdwg.mxu0
    %v590 = vxor.u32 %v587, 2147483648
    %v591 = vmul.f32 %v590, 1.442695
    %v592 = vpow.pop %v591
    %v593 = vadd.f32 %v592, 1.0
    %v594 = vrcp.pop %v593
    %v595 = vmul.f32 1.0, %v594
    %v596 = vld [vmem:[%s5] sm:$0xff]
    %v597 = vld [vmem:[%s5 + $0x8] sm:$0xff]
    %v598 = vld [vmem:[%s5 + $0x10] sm:$0xff]
    %v599 = vld [vmem:[%s5 + $0x18] sm:$0xff]
    %v601 = vsel %vm430, %v595, 0
    %603 = vmatprep.subr.mxu0 0.0
    %604 = vmatpush1.msra.mxu0 %v596
    %605 = vmatprep.subr.mxu0 0.0
    %606 = vmatpush1.msra.mxu0 %v597
    %607 = vmatprep.subr.mxu0 0.0
    %608 = vmatpush1.msra.mxu0 %v598
    %609 = vmatprep.subr.mxu0 0.0
    %610 = vmatpush1.msra.mxu0 %v599
    %611 = vmatprep.subr.mxu0 0.0
    %612 = vmatpush1.msra.mxu0 0.0
    %613 = vmatprep.subr.mxu0 0.0
    %614 = vmatpush1.msra.mxu0 0.0
    %615 = vmatprep.subr.mxu0 0.0
    %616 = vmatpush1.msra.mxu0 0.0
    %617 = vmatprep.subr.mxu0 0.0
    %618 = vmatpush1.msra.mxu0 0.0
    %619 = vmatprep.subr.mxu0 0.0
    %620 = vmatpush1.msra.mxu0 0.0
    %621 = vmatprep.subr.mxu0 0.0
    %622 = vmatpush1.msra.mxu0 0.0
    %623 = vmatprep.subr.mxu0 0.0
    %624 = vmatpush1.msra.mxu0 0.0
    %625 = vmatprep.subr.mxu0 0.0
    %626 = vmatpush1.msra.mxu0 0.0
    %627 = vmatprep.subr.mxu0 0.0
    %628 = vmatpush1.msra.mxu0 0.0
    %629 = vmatprep.subr.mxu0 0.0
    %630 = vmatpush1.msra.mxu0 0.0
    %631 = vmatprep.subr.mxu0 0.0
    %632 = vmatpush1.msra.mxu0 0.0
    %633 = vmatprep.subr.mxu0 0.0
    %634 = vmatpush1.msra.mxu0 0.0
    %635 = vmatprep.subr.mxu0 0.0
    %636 = vmatpush1.msra.mxu0 0.0
    %637 = vmatprep.subr.mxu0 0.0
    %638 = vmatpush1.msra.mxu0 0.0
    %639 = vmatprep.subr.mxu0 0.0
    %640 = vmatpush1.msra.mxu0 0.0
    %641 = vmatprep.subr.mxu0 0.0
    %642 = vmatpush1.msra.mxu0 0.0
    %643 = vmatprep.subr.mxu0 0.0
    %644 = vmatpush1.msra.mxu0 0.0
    %645 = vmatprep.subr.mxu0 0.0
    %646 = vmatpush1.msra.mxu0 0.0
    %647 = vmatprep.subr.mxu0 0.0
    %648 = vmatpush1.msra.mxu0 0.0
    %649 = vmatprep.subr.mxu0 0.0
    %650 = vmatpush1.msra.mxu0 0.0
    %651 = vmatprep.subr.mxu0 0.0
    %652 = vmatpush1.msra.mxu0 0.0
    %653 = vmatprep.subr.mxu0 0.0
    %654 = vmatpush1.msra.mxu0 0.0
    %655 = vmatprep.subr.mxu0 0.0
    %656 = vmatpush1.msra.mxu0 0.0
    %657 = vmatprep.subr.mxu0 0.0
    %658 = vmatpush1.msra.mxu0 0.0
    %659 = vmatprep.subr.mxu0 0.0
    %660 = vmatpush1.msra.mxu0 0.0
    %661 = vmatprep.subr.mxu0 0.0
    %662 = vmatpush1.msra.mxu0 0.0
    %663 = vmatprep.subr.mxu0 0.0
    %664 = vmatpush1.msra.mxu0 0.0
    %665 = vmatprep.subr.mxu0 0.0
    %666 = vmatpush1.msra.mxu0 0.0
    %667 = vmatprep.mubr.f32.mxu0 0.0
    %668 = vmatmul.mubr.f32.gmra.mrb[0].mxu0 %v601
    %v669 = vpop.f32.mrb[0].mxu0
    %v670 = vadd.f32 0.0, %v669
    %v671 = vpop.f32.mrb[0].mxu0
    %672 = vdwg.mxu0
    %v675 = vunpack.c.l.s4 1966171168
    %v676 = vunpack.c.0.s8 %v675
    %v677 = vlaneseq
    %v678 = vshrl.u32 %v677, 7
    %v679 = vsub.s32 %v676, %v678
    %v680 = vrot.slane %v670, %v679
    %v681 = vcombine.high %v680, %v680
    %v683 = vunpack.c.l.s4 1966171168
    %v684 = vunpack.c.0.s8 %v683
    %v685 = vlaneseq
    %v686 = vshrl.u32 %v685, 7
    %v687 = vsub.s32 %v684, %v686
    %v688 = vrot.slane %v680, %v687
    %v690 = vunpack.c.l.s4 1966171168
    %v691 = vunpack.c.0.s8 %v690
    %v692 = vlaneseq
    %v693 = vshrl.u32 %v692, 7
    %v694 = vsub.s32 %v691, %v693
    %v695 = vrot.slane %v681, %v694
    %v696 = vlaneseq
    %v697 = vshrl.u32 %v696, 7
    %v698 = vsub.s32 0, %v697
    %v699 = vrot.slane %v688, %v698
    %v700 = vlaneseq
    %v701 = vshrl.u32 %v700, 7
    %v702 = vsub.s32 0, %v701
    %v703 = vrot.slane %v695, %v702
    %v706 = vmul.f32 %v246, %v699
    %v707 = vmul.f32 %v247, %v699
    %v708 = vmul.f32 %v248, %v699
    %v709 = vmul.f32 %v249, %v699
    %v710 = vmul.f32 %v250, %v699
    %v711 = vmul.f32 %v251, %v699
    %v712 = vmul.f32 %v252, %v699
    %v713 = vmul.f32 %v253, %v699
    %v714 = vmul.f32 %v254, %v703
    %v715 = vmul.f32 %v255, %v703
    %v716 = vmul.f32 %v256, %v703
    %v717 = vmul.f32 %v257, %v703
    %v718 = vmul.f32 %v258, %v703
    %v719 = vmul.f32 %v259, %v703
    %v720 = vmul.f32 %v260, %v703
    %v721 = vmul.f32 %v261, %v703
    %722 = vst [vmem:[#allocation2] sm:$0xff] %v706
    %723 = vst [vmem:[#allocation2 + $0x8] sm:$0xff] %v707
    %724 = vst [vmem:[#allocation2 + $0x10] sm:$0xff] %v708
    %725 = vst [vmem:[#allocation2 + $0x18] sm:$0xff] %v709
    %726 = vst [vmem:[#allocation2 + $0x20] sm:$0xff] %v710
    %727 = vst [vmem:[#allocation2 + $0x28] sm:$0xff] %v711
    %728 = vst [vmem:[#allocation2 + $0x30] sm:$0xff] %v712
    %729 = vst [vmem:[#allocation2 + $0x38] sm:$0xff] %v713
    %730 = vst [vmem:[#allocation2 + $0x40] sm:$0xff] %v714
    %731 = vst [vmem:[#allocation2 + $0x48] sm:$0xff] %v715
    %732 = vst [vmem:[#allocation2 + $0x50] sm:$0xff] %v716
    %733 = vst [vmem:[#allocation2 + $0x58] sm:$0xff] %v717
    %734 = vst [vmem:[#allocation2 + $0x60] sm:$0xff] %v718
    %735 = vst [vmem:[#allocation2 + $0x68] sm:$0xff] %v719
    %736 = vst [vmem:[#allocation2 + $0x70] sm:$0xff] %v720
    %737 = vst [vmem:[#allocation2 + $0x78] sm:$0xff] %v721
    // Predicated region
    $region42: #{tpu_custom_call.1} parent=1 // pred_check
      _
    $region43: #{tpu_custom_call.1} parent=1 // pred_check_branch
      %739 = sbr.rel (0) target = $region45
    $region44: #{tpu_custom_call.1} parent=1 // pred_region
      %s741 = ssub.s32 2048, 2048
      %742 = vsyncadd [#allocation3], %s741
      %s743 = sshll.u32 [#allocation2], 4
      %s744 = int_to_ptr.vmem [resolvable:$true] %s743
      %749 = dma.vmem_to_hbm [thread:$0]  %s744, 2048, %s10, [#allocation3], 128, 128, 8
    $region45: #{tpu_custom_call.1} parent=1 // pred_fallthru
      _
    // Predicated region
    $region46: #{tpu_custom_call.1} parent=1 // pred_check
      _
    $region47: #{tpu_custom_call.1} parent=1 // pred_check_branch
      %751 = sbr.rel (0) target = $region49
    $region48: #{tpu_custom_call.1} parent=1 // pred_region
      %752 = dma.done [#allocation3], 2048
    $region49: #{tpu_custom_call.1} parent=1 // pred_fallthru
      _
    %753 = vsyncpa [#allocation3], 1

</llo_original>
